<compile_context>
chip_gen: v7x
topology: tpu7x:2x2x1
jax: 0.10.0
libtpu: 0.0.40
codegen_flags: <defaults>
</compile_context>

<pallas_src>
import functools
import math

import jax
import jax.numpy as jnp
from jax import lax
from jax.experimental import pallas as pl
from jax.experimental.pallas import tpu as pltpu


def _triple(x):
    if isinstance(x, (tuple, list)):
        assert len(x) == 3
        return tuple(int(v) for v in x)
    return (int(x),) * 3


def _round_up(a, b):
    return -(-a // b) * b


def _vmem_capacity_bytes():
    try:
        info = pltpu.get_tpu_info()
        for attr in ("vmem_capacity_bytes", "vmem_bytes"):
            v = getattr(info, attr, None)
            if v:
                return int(v)
    except Exception:
        pass
    return 64 * 2**20  # conservative default (v7x per-TensorCore VMEM)


# -----------------------------------------------------------------------------
# One grid step = one (group, co-tile, batch-tile, out-depth-plane, depth-tap).
#   x_ref : (1, T_n, R, Ck)          packed input plane(s), bf16
#   w_ref : (1, kd*n_h_taps, Ck, tco) resident weight slab, bf16
#   b_ref : (1, 1, tco)              bias tile, f32
#   o_ref : (1, T_n, M, tco)         output plane tile, f32 (accumulator itself)
# Grid = (G, n_co, N//T_n, Do, kd); the last axis (depth tap) is the reduction.
# -----------------------------------------------------------------------------
def _conv3d_kernel(x_ref, w_ref, b_ref, o_ref, *, n_h_taps, row_step, rows, t_n):
    zi = pl.program_id(4)
    tco = o_ref.shape[-1]

    @pl.when(zi == 0)
    def _init():
        bias_row = b_ref[0]                               # (1, tco), f32
        for t in range(t_n):
            o_ref[0, t] = jnp.broadcast_to(bias_row, (rows, tco))

    for t in range(t_n):
        for yi in range(n_h_taps):                        # static, short -> unrolled
            sub = x_ref[0, t, pl.ds(yi * row_step, rows), :]   # (M, Ck) contiguous
            w_tap = w_ref[0, zi * n_h_taps + yi]               # (Ck, tco)
            # per-tap ref accumulation (bounded live range; MRB-friendly on v7x)
            o_ref[0, t] += jnp.dot(sub, w_tap,
                                   preferred_element_type=jnp.float32)


# -----------------------------------------------------------------------------
# F.conv3d semantics (zero padding); groups / stride / dilation supported.
# -----------------------------------------------------------------------------
def conv3d_pallas(x, weight, bias, stride, padding, dilation, groups,
                  compute_dtype=jnp.bfloat16):
    N, Cin, D, H, W = x.shape
    Cout, Cin_g, kd, kh, kw = weight.shape
    G = int(groups)
    assert Cin_g * G == Cin and Cout % G == 0
    Cout_g = Cout // G
    sd, sh, sw = stride
    pd, ph, pw = padding
    dd, dh, dw = dilation
    itemsize = jnp.dtype(compute_dtype).itemsize

    Dp, Hp, Wp = D + 2 * pd, H + 2 * ph, W + 2 * pw
    Do = (Dp - dd * (kd - 1) - 1) // sd + 1
    Ho = (Hp - dh * (kh - 1) - 1) // sh + 1
    Wo = (Wp - dw * (kw - 1) - 1) // sw + 1
    assert Do > 0 and Ho > 0 and Wo > 0, "output size must be positive"

    # K-packing strategy: W taps (plus W stride/dilation) always fold into the
    # GEMM K dim host-side (kw x blow-up).  H taps fold too when the H stride
    # is non-trivial (stride-native) or the packed K would still starve the MXU.
    pack_h = (sh != 1) or (Cin_g * kw < 64)
    n_h_taps = 1 if pack_h else kh
    Ck = Cin_g * kw * (kh if pack_h else 1)   # GEMM K per in-kernel dot
    KT = kd * n_h_taps                        # resident weight taps per group
    M = Ho * Wo                               # GEMM rows per output plane
    R = M if pack_h else Hp * Wo              # resident rows per input plane
    row_step = dh * Wo                        # per-H-tap row offset (sh == 1 path)

    # ---- activations: channels-last, grouped, padded, taps packed into K ----
    xg = x.reshape(N, G, Cin_g, D, H, W).transpose(1, 3, 0, 4, 5, 2)  # (G,D,N,H,W,C)
    xg = xg.astype(compute_dtype)
    xg = jnp.pad(xg, ((0, 0), (pd, pd), (0, 0), (ph, ph), (pw, pw), (0, 0)))
    w_idx = (jnp.arange(Wo) * sw)[:, None] + jnp.arange(kw) * dw      # (Wo, kw)
    if pack_h:
        h_idx = (jnp.arange(Ho) * sh)[:, None] + jnp.arange(kh) * dh  # (Ho, kh)
        xg = xg[:, :, :, h_idx]                       # (G,Dp,N,Ho,kh,Wp,C)
        xg = xg[:, :, :, :, :, w_idx]                 # (G,Dp,N,Ho,kh,Wo,kw,C)
        xg = xg.transpose(0, 1, 2, 3, 5, 4, 6, 7)     # (G,Dp,N,Ho,Wo,kh,kw,C)
    else:
        xg = xg[:, :, :, :, w_idx]                    # (G,Dp,N,Hp,Wo,kw,C)
    xg = xg.reshape(G * Dp, N, R, Ck)

    # ---- generation-aware budgets ----
    Cp = _round_up(Cout_g, 128)
    vmem_cap = _vmem_capacity_bytes()
    budget = (vmem_cap * 3) // 4                        # ~48 MiB v7x, ~96 MiB v5e/v6e
    w_cap_bytes = 12 * 2**20 if vmem_cap >= 96 * 2**20 else 4 * 2**20

    x_item = _round_up(R, 16) * _round_up(Ck, 128) * itemsize   # one plane, one batch item

    def _o_item(tco_):
        return _round_up(M, 8) * tco_ * 4

    def _w_blk(tco_):
        return KT * _round_up(Ck, 16) * tco_ * itemsize

    def _est(tco_, tn_):
        # weights/bias resident (+1 shadow buffer), x/o double-buffered, slack
        return (2 * _w_blk(tco_) + 2 * 8 * tco_ * 4
                + 2 * tn_ * (x_item + _o_item(tco_)) + 2 * 2**20)

    # ---- out-channel tile: prefer >=256-wide (v6e/v7x MXU), must divide Cp ----
    per_col_bytes = KT * Ck * itemsize
    cap_cols = max(128, min(Cp, (w_cap_bytes // per_col_bytes) // 128 * 128))
    cands = [c for c in range(cap_cols, 127, -128) if Cp % c == 0]
    cands = sorted(cands, key=lambda c: (c % 256 != 0, -c))
    tco = 128
    for c in cands:
        if _est(c, 1) <= budget:
            tco = c
            break
    n_co = Cp // tco

    # ---- batch-tile: amortize per-step overhead when planes are small ----
    t_n = 1
    for d in range(2, min(N, 32) + 1):
        if N % d:
            continue
        if d * M > 4096:
            break
        if _est(tco, d) <= budget:
            t_n = d
    n_blk = N // t_n

    est = _est(tco, t_n)
    vmem_limit = int(min(budget, max(est + 4 * 2**20, 32 * 2**20)))

    # ---- weights: (G, KT, Ck, Cp), tap order matching the x packing ----
    wg = weight.reshape(G, Cout_g, Cin_g, kd, kh, kw).transpose(0, 3, 4, 5, 2, 1)
    wg = jnp.pad(wg, ((0, 0),) * 5 + ((0, Cp - Cout_g),))
    wg = wg.reshape(G, KT, Ck, Cp).astype(compute_dtype)

    if bias is None:
        bz = jnp.zeros((G, 1, Cp), jnp.float32)
    else:
        bz = jnp.pad(bias.astype(jnp.float32).reshape(G, 1, Cout_g),
                     ((0, 0), (0, 0), (0, Cp - Cout_g)))

    flops = 2 * N * G * Do * M * Cp * Cin_g * kd * kh * kw
    bytes_accessed = (G * n_co * n_blk * Do * kd * t_n * R * Ck * itemsize  # x (kd*n_co re-reads)
                      + wg.size * itemsize
                      + G * Do * N * M * Cp * 4
                      + bz.size * 4)

    kernel = functools.partial(_conv3d_kernel, n_h_taps=n_h_taps,
                               row_step=row_step, rows=M, t_n=t_n)

    out = pl.pallas_call(
        kernel,
        out_shape=jax.ShapeDtypeStruct((G * Do, N, M, Cp), jnp.float32),
        grid_spec=pltpu.PrefetchScalarGridSpec(
            num_scalar_prefetch=0,
            grid=(G, n_co, n_blk, Do, kd),
            in_specs=[
                # packed input plane(s): one (group, depth plane, batch tile)
                pl.BlockSpec((1, t_n, R, Ck),
                             lambda g, co, nb, do, zi:
                                 (g * Dp + do * sd + zi * dd, nb, 0, 0)),
                # resident weight slab: all taps of this (group, co-tile)
                pl.BlockSpec((1, KT, Ck, tco),
                             lambda g, co, nb, do, zi: (g, 0, 0, co)),
                # bias tile
                pl.BlockSpec((1, 1, tco),
                             lambda g, co, nb, do, zi: (g, 0, co)),
            ],
            out_specs=pl.BlockSpec(
                (1, t_n, M, tco),
                lambda g, co, nb, do, zi: (g * Do + do, nb, 0, co)),
        ),
        compiler_params=pltpu.CompilerParams(
            dimension_semantics=("parallel", "parallel", "parallel", "parallel",
                                 "arbitrary"),
            vmem_limit_bytes=vmem_limit,
        ),
        cost_estimate=pl.CostEstimate(flops=int(flops), transcendentals=0,
                                      bytes_accessed=int(bytes_accessed)),
    )(xg, wg, bz)

    # Strip channel lane padding; single boundary transpose back to NCDHW.
    out = out[:, :, :, :Cout_g].reshape(G, Do, N, Ho, Wo, Cout_g)
    out = out.transpose(2, 0, 5, 1, 3, 4).reshape(N, Cout, Do, Ho, Wo)
    return out


class Conv3dPallas:
    """JAX/Pallas mirror of torch.nn.Conv3d (padding_mode='zeros').

    Note: activations/weights are computed in bf16 on the MXU with f32
    accumulation (documented precision mode; pass compute_dtype=jnp.float32
    for a bit-closer match at ~8x lower MXU throughput).
    """

    def __init__(self, in_channels, out_channels, kernel_size, stride=1,
                 padding=0, dilation=1, groups=1, bias=True, *, key,
                 compute_dtype=jnp.bfloat16):
        self.in_channels = in_channels
        self.out_channels = out_channels
        self.kernel_size = _triple(kernel_size)
        self.stride = _triple(stride)
        self.padding = _triple(padding)
        self.dilation = _triple(dilation)
        self.groups = int(groups)
        self.compute_dtype = compute_dtype
        assert in_channels % groups == 0 and out_channels % groups == 0

        kd, kh, kw = self.kernel_size
        fan_in = (in_channels // groups) * kd * kh * kw
        # kaiming_uniform_(a=sqrt(5)) => U(-1/sqrt(fan_in), 1/sqrt(fan_in))
        bound = 1.0 / math.sqrt(fan_in)
        wkey, bkey = jax.random.split(key)
        self.weight = jax.random.uniform(
            wkey, (out_channels, in_channels // groups, kd, kh, kw),
            dtype=jnp.float32, minval=-bound, maxval=bound)
        if bias:
            self.bias = jax.random.uniform(
                bkey, (out_channels,), dtype=jnp.float32,
                minval=-bound, maxval=bound)
        else:
            self.bias = None

    def __call__(self, x):
        return conv3d_pallas(x, self.weight, self.bias, self.stride,
                             self.padding, self.dilation, self.groups,
                             self.compute_dtype)


if __name__ == "__main__":
    key = jax.random.PRNGKey(0)
    k1, k2, k3, k4, k5, k6 = jax.random.split(key, 6)

    def reference(x, m):
        ref = lax.conv_general_dilated(
            x, m.weight,
            window_strides=m.stride,
            padding=[(p, p) for p in m.padding],
            rhs_dilation=m.dilation,
            dimension_numbers=("NCDHW", "OIDHW", "NCDHW"),
            feature_group_count=m.groups,
        )
        if m.bias is not None:
            ref = ref + m.bias.reshape(1, -1, 1, 1, 1)
        return ref

    # Case 1: plain 3x3x3 conv — N=2, Cin=4, Cout=8, 8^3 volume, pad=1.
    m1 = Conv3dPallas(4, 8, 3, stride=1, padding=1, dilation=1, groups=1,
                      bias=True, key=k1)
    x1 = jax.random.normal(k2, (2, 4, 8, 8, 8), dtype=jnp.float32)
    out1 = jax.block_until_ready(m1(x1))
    ref1 = reference(x1, m1)
    assert out1.shape == ref1.shape == (2, 8, 8, 8, 8), "bad shape (case 1)"
    assert jnp.allclose(out1, ref1, rtol=2e-2, atol=2e-2), "mismatch (case 1)"

    # Case 2: grouped, spatially strided, dilated conv (stride-native H/W path).
    m2 = Conv3dPallas(4, 4, 3, stride=(1, 2, 2), padding=(1, 2, 1),
                      dilation=(1, 2, 1), groups=2, bias=True, key=k3)
    x2 = jax.random.normal(k4, (1, 4, 6, 8, 8), dtype=jnp.float32)
    out2 = jax.block_until_ready(m2(x2))
    ref2 = reference(x2, m2)
    assert out2.shape == ref2.shape, "bad shape (case 2)"
    assert jnp.allclose(out2, ref2, rtol=2e-2, atol=2e-2), "mismatch (case 2)"

    # Case 3: channel-rich conv (kw-only K packing, in-kernel kh tap loop).
    m3 = Conv3dPallas(64, 128, 3, stride=1, padding=1, dilation=1, groups=1,
                      bias=True, key=k5)
    x3 = jax.random.normal(k6, (1, 64, 4, 8, 8), dtype=jnp.float32)
    out3 = jax.block_until_ready(m3(x3))
    ref3 = reference(x3, m3)
    assert out3.shape == ref3.shape == (1, 128, 4, 8, 8), "bad shape (case 3)"
    assert jnp.allclose(out3, ref3, rtol=2e-2, atol=2e-2), "mismatch (case 3)"

    print("KERNEL_OK")
</pallas_src>

<mosaic_0001>
module attributes {stable_mosaic.version = 11 : i64} {
  func.func @_conv3d_kernel(%arg0: i32, %arg1: i32, %arg2: i32, %arg3: i32, %arg4: i32, %arg5: memref<1x2x64x36xbf16, #tpu.memory_space<vmem>>, %arg6: memref<1x3x36x128xbf16, #tpu.memory_space<vmem>>, %arg7: memref<1x1x128xf32, #tpu.memory_space<vmem>>, %arg8: memref<1x2x64x128xf32, #tpu.memory_space<vmem>>) attributes {dimension_semantics = [#tpu.dimension_semantics<parallel>, #tpu.dimension_semantics<parallel>, #tpu.dimension_semantics<parallel>, #tpu.dimension_semantics<parallel>, #tpu.dimension_semantics<arbitrary>], iteration_bounds = array<i64: 1, 1, 1, 8, 3>, scalar_prefetch = 0 : i64, scratch_operands = 0 : i64, tpu.core_type = #tpu.core_type<tc>, window_params = [{transform_indices = @transform_0, window_bounds = array<i64: 1, 2, 64, 36>}, {transform_indices = @transform_1, window_bounds = array<i64: 1, 3, 36, 128>}, {transform_indices = @transform_2, window_bounds = array<i64: 1, 1, 128>}, {transform_indices = @transform_3, window_bounds = array<i64: 1, 2, 64, 128>}]} {
    %c0_i32 = arith.constant 0 : i32
    %0 = arith.cmpi eq, %arg4, %c0_i32 : i32
    %1 = arith.extui %0 : i1 to i32
    %c0_i32_0 = arith.constant 0 : i32
    %2 = arith.cmpi ne, %1, %c0_i32_0 : i32
    scf.if %2 {
      %c0_33 = arith.constant 0 : index
      %c0_34 = arith.constant 0 : index
      %c0_35 = arith.constant 0 : index
      %31 = vector.load %arg7[%c0_33, %c0_34, %c0_35] : memref<1x1x128xf32, #tpu.memory_space<vmem>>, vector<1x1x128xf32>
      %32 = vector.shape_cast %31 : vector<1x1x128xf32> to vector<1x128xf32>
      %33 = vector.shape_cast %32 : vector<1x128xf32> to vector<1x128xf32>
      %34 = vector.broadcast %33 : vector<1x128xf32> to vector<64x128xf32>
      %c0_36 = arith.constant 0 : index
      %c0_37 = arith.constant 0 : index
      %c0_38 = arith.constant 0 : index
      %c0_39 = arith.constant 0 : index
      %35 = vector.load %arg8[%c0_36, %c0_37, %c0_38, %c0_39] : memref<1x2x64x128xf32, #tpu.memory_space<vmem>>, vector<1x1x64x128xf32>
      %36 = vector.shape_cast %35 : vector<1x1x64x128xf32> to vector<64x128xf32>
      %37 = vector.shape_cast %34 : vector<64x128xf32> to vector<1x1x64x128xf32>
      tpu.vector_store %arg8[%c0_36, %c0_37, %c0_38, %c0_39], %37 {strides = array<i32>} : memref<1x2x64x128xf32, #tpu.memory_space<vmem>>, vector<1x1x64x128xf32>,
      %38 = vector.shape_cast %32 : vector<1x128xf32> to vector<1x128xf32>
      %39 = vector.broadcast %38 : vector<1x128xf32> to vector<64x128xf32>
      %c0_40 = arith.constant 0 : index
      %c1_41 = arith.constant 1 : index
      %c0_42 = arith.constant 0 : index
      %c0_43 = arith.constant 0 : index
      %40 = vector.load %arg8[%c0_40, %c1_41, %c0_42, %c0_43] : memref<1x2x64x128xf32, #tpu.memory_space<vmem>>, vector<1x1x64x128xf32>
      %41 = vector.shape_cast %40 : vector<1x1x64x128xf32> to vector<64x128xf32>
      %42 = vector.shape_cast %39 : vector<64x128xf32> to vector<1x1x64x128xf32>
      tpu.vector_store %arg8[%c0_40, %c1_41, %c0_42, %c0_43], %42 {strides = array<i32>} : memref<1x2x64x128xf32, #tpu.memory_space<vmem>>, vector<1x1x64x128xf32>,
    } else {
    }
    %c0 = arith.constant 0 : index
    %c0_1 = arith.constant 0 : index
    %c0_2 = arith.constant 0 : index
    %c0_3 = arith.constant 0 : index
    %3 = vector.load %arg5[%c0, %c0_1, %c0_2, %c0_3] : memref<1x2x64x36xbf16, #tpu.memory_space<vmem>>, vector<1x1x64x36xbf16>
    %4 = vector.shape_cast %3 : vector<1x1x64x36xbf16> to vector<64x36xbf16>
    %c1_i32 = arith.constant 1 : i32
    %5 = arith.muli %arg4, %c1_i32 : i32
    %c0_i32_4 = arith.constant 0 : i32
    %6 = arith.addi %5, %c0_i32_4 : i32
    %c0_5 = arith.constant 0 : index
    %7 = arith.index_cast %6 : i32 to index
    %c0_6 = arith.constant 0 : index
    %c0_7 = arith.constant 0 : index
    %8 = vector.load %arg6[%c0_5, %7, %c0_6, %c0_7] : memref<1x3x36x128xbf16, #tpu.memory_space<vmem>>, vector<1x1x36x128xbf16>
    %9 = vector.shape_cast %8 : vector<1x1x36x128xbf16> to vector<36x128xbf16>
    %c0_8 = arith.constant 0 : index
    %c0_9 = arith.constant 0 : index
    %c0_10 = arith.constant 0 : index
    %c0_11 = arith.constant 0 : index
    %10 = vector.load %arg8[%c0_8, %c0_9, %c0_10, %c0_11] : memref<1x2x64x128xf32, #tpu.memory_space<vmem>>, vector<1x1x64x128xf32>
    %11 = vector.shape_cast %10 : vector<1x1x64x128xf32> to vector<64x128xf32>
    %cst = arith.constant dense<0.000000e+00> : vector<64x128xf32>
    %12 = tpu.matmul %4, %9, %cst {dimension_numbers = #tpu.dot_dimension_numbers<[1], [0], [0], [1], [0, 0, 1, 1], [], []>} : vector<64x36xbf16>, vector<36x128xbf16>, vector<64x128xf32> -> vector<64x128xf32>
    %13 = arith.addf %11, %12 : vector<64x128xf32>
    %c0_12 = arith.constant 0 : index
    %c0_13 = arith.constant 0 : index
    %c0_14 = arith.constant 0 : index
    %c0_15 = arith.constant 0 : index
    %14 = vector.load %arg8[%c0_12, %c0_13, %c0_14, %c0_15] : memref<1x2x64x128xf32, #tpu.memory_space<vmem>>, vector<1x1x64x128xf32>
    %15 = vector.shape_cast %14 : vector<1x1x64x128xf32> to vector<64x128xf32>
    %16 = vector.shape_cast %13 : vector<64x128xf32> to vector<1x1x64x128xf32>
    tpu.vector_store %arg8[%c0_12, %c0_13, %c0_14, %c0_15], %16 {strides = array<i32>} : memref<1x2x64x128xf32, #tpu.memory_space<vmem>>, vector<1x1x64x128xf32>,
    %c0_16 = arith.constant 0 : index
    %c1 = arith.constant 1 : index
    %c0_17 = arith.constant 0 : index
    %c0_18 = arith.constant 0 : index
    %17 = vector.load %arg5[%c0_16, %c1, %c0_17, %c0_18] : memref<1x2x64x36xbf16, #tpu.memory_space<vmem>>, vector<1x1x64x36xbf16>
    %18 = vector.shape_cast %17 : vector<1x1x64x36xbf16> to vector<64x36xbf16>
    %c1_i32_19 = arith.constant 1 : i32
    %19 = arith.muli %arg4, %c1_i32_19 : i32
    %c0_i32_20 = arith.constant 0 : i32
    %20 = arith.addi %19, %c0_i32_20 : i32
    %c0_21 = arith.constant 0 : index
    %21 = arith.index_cast %20 : i32 to index
    %c0_22 = arith.constant 0 : index
    %c0_23 = arith.constant 0 : index
    %22 = vector.load %arg6[%c0_21, %21, %c0_22, %c0_23] : memref<1x3x36x128xbf16, #tpu.memory_space<vmem>>, vector<1x1x36x128xbf16>
    %23 = vector.shape_cast %22 : vector<1x1x36x128xbf16> to vector<36x128xbf16>
    %c0_24 = arith.constant 0 : index
    %c1_25 = arith.constant 1 : index
    %c0_26 = arith.constant 0 : index
    %c0_27 = arith.constant 0 : index
    %24 = vector.load %arg8[%c0_24, %c1_25, %c0_26, %c0_27] : memref<1x2x64x128xf32, #tpu.memory_space<vmem>>, vector<1x1x64x128xf32>
    %25 = vector.shape_cast %24 : vector<1x1x64x128xf32> to vector<64x128xf32>
    %cst_28 = arith.constant dense<0.000000e+00> : vector<64x128xf32>
    %26 = tpu.matmul %18, %23, %cst_28 {dimension_numbers = #tpu.dot_dimension_numbers<[1], [0], [0], [1], [0, 0, 1, 1], [], []>} : vector<64x36xbf16>, vector<36x128xbf16>, vector<64x128xf32> -> vector<64x128xf32>
    %27 = arith.addf %25, %26 : vector<64x128xf32>
    %c0_29 = arith.constant 0 : index
    %c1_30 = arith.constant 1 : index
    %c0_31 = arith.constant 0 : index
    %c0_32 = arith.constant 0 : index
    %28 = vector.load %arg8[%c0_29, %c1_30, %c0_31, %c0_32] : memref<1x2x64x128xf32, #tpu.memory_space<vmem>>, vector<1x1x64x128xf32>
    %29 = vector.shape_cast %28 : vector<1x1x64x128xf32> to vector<64x128xf32>
    %30 = vector.shape_cast %27 : vector<64x128xf32> to vector<1x1x64x128xf32>
    tpu.vector_store %arg8[%c0_29, %c1_30, %c0_31, %c0_32], %30 {strides = array<i32>} : memref<1x2x64x128xf32, #tpu.memory_space<vmem>>, vector<1x1x64x128xf32>,
    return
  }
  func.func @transform_0(%arg0: i32, %arg1: i32, %arg2: i32, %arg3: i32, %arg4: i32) -> (i32, i32, i32, i32) {
    %c10_i32 = arith.constant 10 : i32
    %0 = arith.muli %arg0, %c10_i32 : i32
    %c1_i32 = arith.constant 1 : i32
    %1 = arith.muli %arg3, %c1_i32 : i32
    %2 = arith.addi %0, %1 : i32
    %c1_i32_0 = arith.constant 1 : i32
    %3 = arith.muli %arg4, %c1_i32_0 : i32
    %4 = arith.addi %2, %3 : i32
    %c0_i32 = arith.constant 0 : i32
    %c0_i32_1 = arith.constant 0 : i32
    %c0_i32_2 = arith.constant 0 : i32
    return %4, %arg2, %c0_i32, %c0_i32_1 : i32, i32, i32, i32
  }
  func.func @transform_1(%arg0: i32, %arg1: i32, %arg2: i32, %arg3: i32, %arg4: i32) -> (i32, i32, i32, i32) {
    %c0_i32 = arith.constant 0 : i32
    %c0_i32_0 = arith.constant 0 : i32
    %c0_i32_1 = arith.constant 0 : i32
    return %arg0, %c0_i32, %c0_i32_0, %arg1 : i32, i32, i32, i32
  }
  func.func @transform_2(%arg0: i32, %arg1: i32, %arg2: i32, %arg3: i32, %arg4: i32) -> (i32, i32, i32) {
    %c0_i32 = arith.constant 0 : i32
    %c0_i32_0 = arith.constant 0 : i32
    return %arg0, %c0_i32, %arg1 : i32, i32, i32
  }
  func.func @transform_3(%arg0: i32, %arg1: i32, %arg2: i32, %arg3: i32, %arg4: i32) -> (i32, i32, i32, i32) {
    %c8_i32 = arith.constant 8 : i32
    %0 = arith.muli %arg0, %c8_i32 : i32
    %1 = arith.addi %0, %arg3 : i32
    %c0_i32 = arith.constant 0 : i32
    %c0_i32_0 = arith.constant 0 : i32
    return %1, %arg2, %c0_i32, %arg1 : i32, i32, i32, i32
  }
}

</mosaic_0001>

<llo_original>
// kernel: tpu_custom_call.1
$region0: #{tpu_custom_call.1}
  #allocation0 [shape = 'u32[]', space=smem, size = 0x4, offset = 0x4, fixed_abs, tag = 'smem constant byte address 0x4 - core index']
  #allocation1 [shape = 'u32[144,128]{1,0:T(1,128)}', space=vmem, size = 0x12000, scoped, tag = 'internal scratch']
  %s0 = inlined_call_operand.vmem [shape: bf16[10,2,64,36], index: 0, kind: input, shape index: {}]
  %s1 = inlined_call_operand.vmem [shape: bf16[1,3,36,128], index: 1, kind: input, shape index: {}]
  %s2 = inlined_call_operand.vmem [shape: f32[1,1,128], index: 2, kind: input, shape index: {}]
  %s3 = inlined_call_operand.hbm [shape: f32[8,2,64,128], index: 3, kind: output, shape index: {}]
  %s4 = sld [smem:[#allocation0]]
  $region49: #{tpu_custom_call.1} parent=0
    _
  %s6 = ssub.s32 1, %s4
  %s7 = scalar_select 0, %s6, %s4
  $region1: #{tpu_custom_call.1} parent=0
    #allocation2 [shape = 'u8[131072]{0}', space=vmem, size = 0x20000, scoped, tag = 'output window, operand 0']
    #allocation3 [shape = 's32[2]{0}', space=sflag, size = 0x8, scoped, tag = 'scoped memory for tpu_custom_call.1']
    %8 = vsyncpa [#allocation3], 0
    %s9 = scalar_lea.sflag [#allocation3], 1
    %10 = vsyncpa %s9, 0
    loop: start=0, step=1, limit=26
    $region2: #{tpu_custom_call.1} parent=1 // loop_pre_header
      _
    $region3: #{tpu_custom_call.1} parent=1 // loop_header
      %s12 = sphi 0, %s16
      %p13 = scmp.ge.s32.totalorder %s12, 26
      %s19 = sphi 0, %s52
      %s20 = sphi 0, %s48
      %s21 = sphi 0, %s44
      %s22 = sphi 0, %s40
      %s23 = sphi 0, %s36
      %s24 = sphi 0, %s19
      %s25 = sphi 0, %s20
      %s26 = sphi 0, %s21
      %s27 = sphi 0, %s22
      %s28 = sphi 0, %s23
      %s29 = sphi 0, %s24
      %s30 = sphi 0, %s25
      %s31 = sphi 0, %s26
      %s32 = sphi 0, %s27
      %s33 = sphi 0, %s28
      %s63 = sphi 0, %s65
      %s66 = sphi 0, %s63
      %s67 = sphi 0, %s66
      %s83 = sphi 0, %s67
      %s91 = sphi 0, %s93
      %s94 = sphi 0, %s91
      %s95 = sphi 0, %s94
      %s111 = sphi 0, %s95
      %s119 = sphi 0, %s121
      %s122 = sphi 0, %s119
      %s123 = sphi 0, %s122
      %s139 = sphi 0, %s123
      %s153 = sphi 0, %s155
      %s156 = sphi 0, %s153
      %s157 = sphi 0, %s156
      %s173 = sphi 0, %s157
    $region4: #{tpu_custom_call.1} parent=1 // loop_header_branch
      %15 = sbr.rel (%p13) target = $region8
    $region5: #{tpu_custom_call.1} parent=1 // loop_body
      %s17 = ssub.s32 %s12, 1
      %s18 = ssub.s32 %s12, 2
      %s34 = sadd.s32 1, %s23
      %p35 = scmp.ge.s32.totalorder %s34, 3
      %s36 = scalar_select %p35, 0, %s34
      %s37 = sadd.s32 1, %s22
      %s38 = scalar_select %p35, %s37, %s22
      %p39 = scmp.ge.s32.totalorder %s38, 8
      %s40 = scalar_select %p39, 0, %s38
      %s41 = sadd.s32 1, %s21
      %s42 = scalar_select %p39, %s41, %s21
      %p43 = scmp.ge.s32.totalorder %s42, 1
      %s44 = scalar_select %p43, 0, %s42
      %s45 = sadd.s32 1, %s20
      %s46 = scalar_select %p43, %s45, %s20
      %p47 = scmp.ge.s32.totalorder %s46, 1
      %s48 = scalar_select %p47, 0, %s46
      %s49 = sadd.s32 1, %s19
      %s50 = scalar_select %p47, %s49, %s19
      %p51 = scmp.ge.s32.totalorder %s50, 1
      %s52 = scalar_select %p51, 0, %s50
      %s53 = smul.u32 %s19, 10
      %s54 = sadd.s32 %s53, %s22
      %s55 = sadd.s32 %s54, %s23
      %s56 = smul.u32 %s52, 10
      %s57 = sadd.s32 %s56, %s40
      %s58 = sadd.s32 %s57, %s36
      %s59 = ssub.s32 %s55, %s58
      %s60 = ssub.s32 %s21, %s44
      %s61 = sor.u32 %s59, %s60
      %p62 = scmp.eq.s32.totalorder %s61, 0
      %s64 = sadd.s32 %s63, 1
      %s65 = scalar_select %p62, %s63, %s64
      %p68 = pneg %p62
      %p69 = scmp.eq.s32.totalorder %s12, 23
      %p70 = por %p68, %p69
      %p71 = scmp.ne.s32.totalorder %s63, %s66
      %p72 = scmp.eq.s32.totalorder %s12, 0
      %p73 = por %p71, %p72
      %p74 = scmp.ne.s32.totalorder %s63, %s66
      %p75 = scmp.eq.s32.totalorder %s17, 23
      %p76 = por %p74, %p75
      %p77 = scmp.ne.s32.totalorder %s66, %s67
      %p78 = scmp.eq.s32.totalorder %s17, 0
      %p79 = por %p77, %p78
      %p80 = scmp.ne.s32.totalorder %s66, %s67
      %p81 = scmp.eq.s32.totalorder %s18, 23
      %p82 = por %p80, %p81
      %p84 = scmp.ne.s32.totalorder %s67, %s83
      %p85 = scmp.eq.s32.totalorder %s18, 0
      %p86 = por %p84, %p85
      %s87 = ssub.s32 %s19, %s52
      %s88 = ssub.s32 %s20, %s48
      %s89 = sor.u32 %s87, %s88
      %p90 = scmp.eq.s32.totalorder %s89, 0
      %s92 = sadd.s32 %s91, 1
      %s93 = scalar_select %p90, %s91, %s92
      %p96 = pneg %p90
      %p97 = scmp.eq.s32.totalorder %s12, 23
      %p98 = por %p96, %p97
      %p99 = scmp.ne.s32.totalorder %s91, %s94
      %p100 = scmp.eq.s32.totalorder %s12, 0
      %p101 = por %p99, %p100
      %p102 = scmp.ne.s32.totalorder %s91, %s94
      %p103 = scmp.eq.s32.totalorder %s17, 23
      %p104 = por %p102, %p103
      %p105 = scmp.ne.s32.totalorder %s94, %s95
      %p106 = scmp.eq.s32.totalorder %s17, 0
      %p107 = por %p105, %p106
      %p108 = scmp.ne.s32.totalorder %s94, %s95
      %p109 = scmp.eq.s32.totalorder %s18, 23
      %p110 = por %p108, %p109
      %p112 = scmp.ne.s32.totalorder %s95, %s111
      %p113 = scmp.eq.s32.totalorder %s18, 0
      %p114 = por %p112, %p113
      %s115 = ssub.s32 %s19, %s52
      %s116 = ssub.s32 %s20, %s48
      %s117 = sor.u32 %s115, %s116
      %p118 = scmp.eq.s32.totalorder %s117, 0
      %s120 = sadd.s32 %s119, 1
      %s121 = scalar_select %p118, %s119, %s120
      %p124 = pneg %p118
      %p125 = scmp.eq.s32.totalorder %s12, 23
      %p126 = por %p124, %p125
      %p127 = scmp.ne.s32.totalorder %s119, %s122
      %p128 = scmp.eq.s32.totalorder %s12, 0
      %p129 = por %p127, %p128
      %p130 = scmp.ne.s32.totalorder %s119, %s122
      %p131 = scmp.eq.s32.totalorder %s17, 23
      %p132 = por %p130, %p131
      %p133 = scmp.ne.s32.totalorder %s122, %s123
      %p134 = scmp.eq.s32.totalorder %s17, 0
      %p135 = por %p133, %p134
      %p136 = scmp.ne.s32.totalorder %s122, %s123
      %p137 = scmp.eq.s32.totalorder %s18, 23
      %p138 = por %p136, %p137
      %p140 = scmp.ne.s32.totalorder %s123, %s139
      %p141 = scmp.eq.s32.totalorder %s18, 0
      %p142 = por %p140, %p141
      %s143 = smul.u32 %s19, 8
      %s144 = sadd.s32 %s143, %s22
      %s145 = smul.u32 %s52, 8
      %s146 = sadd.s32 %s145, %s40
      %s147 = ssub.s32 %s144, %s146
      %s148 = ssub.s32 %s21, %s44
      %s149 = sor.u32 %s147, %s148
      %s150 = ssub.s32 %s20, %s48
      %s151 = sor.u32 %s149, %s150
      %p152 = scmp.eq.s32.totalorder %s151, 0
      %s154 = sadd.s32 %s153, 1
      %s155 = scalar_select %p152, %s153, %s154
      %p158 = pneg %p152
      %p159 = scmp.eq.s32.totalorder %s12, 23
      %p160 = por %p158, %p159
      %p161 = scmp.ne.s32.totalorder %s153, %s156
      %p162 = scmp.eq.s32.totalorder %s12, 0
      %p163 = por %p161, %p162
      %p164 = scmp.ne.s32.totalorder %s153, %s156
      %p165 = scmp.eq.s32.totalorder %s17, 23
      %p166 = por %p164, %p165
      %p167 = scmp.ne.s32.totalorder %s156, %s157
      %p168 = scmp.eq.s32.totalorder %s17, 0
      %p169 = por %p167, %p168
      %p170 = scmp.ne.s32.totalorder %s156, %s157
      %p171 = scmp.eq.s32.totalorder %s18, 23
      %p172 = por %p170, %p171
      %p174 = scmp.ne.s32.totalorder %s157, %s173
      %p175 = scmp.eq.s32.totalorder %s18, 0
      %p176 = por %p174, %p175
      %p177 = scmp.le.s32.totalorder 1, %s12
      %p178 = scmp.lt.s32.totalorder %s12, 25
      %p179 = pnand %p177, %p178
      %p180 = pneg %p179
      // Predicated region
      $region9: #{tpu_custom_call.1} parent=5 // pred_check
        _
      $region10: #{tpu_custom_call.1} parent=5 // pred_check_branch
        %182 = sbr.rel (%p179) target = $region12
      $region11: #{tpu_custom_call.1} parent=5 // pred_region
        %s183 = ssub.s32 %s12, 1
        // Predicated region
        $region13: #{tpu_custom_call.1} parent=11 // pred_check
          %p184 = pneg %p107
        $region14: #{tpu_custom_call.1} parent=11 // pred_check_branch
          %186 = sbr.rel (%p184) target = $region16
        $region15: #{tpu_custom_call.1} parent=11 // pred_region
          %p187 = scmp.lt.s32.totalorder %s24, 0
          %s188 = scalar_select %p187, %s24, 0
          %p189 = scmp.lt.s32.totalorder %s25, 0
          %s190 = scalar_select %p189, %s25, 0
          %s191 = smul.addr %s188, 15
          %s192 = sadd.s32 %s190, %s191
          %s193 = smul.addr %s192, 4
          %s194 = scalar_lea.vmem %s1, %s193
        $region16: #{tpu_custom_call.1} parent=11 // pred_fallthru
          _
        // Predicated region
        $region17: #{tpu_custom_call.1} parent=11 // pred_check
          %p195 = pneg %p135
        $region18: #{tpu_custom_call.1} parent=11 // pred_check_branch
          %197 = sbr.rel (%p195) target = $region20
        $region19: #{tpu_custom_call.1} parent=11 // pred_region
          %p198 = scmp.lt.s32.totalorder %s24, 0
          %s199 = scalar_select %p198, %s24, 0
          %p200 = scmp.lt.s32.totalorder %s25, 0
          %s201 = scalar_select %p200, %s25, 0
          %s202 = sadd.s32 %s201, %s199
          %s203 = scalar_lea.vmem %s2, %s202
        $region20: #{tpu_custom_call.1} parent=11 // pred_fallthru
          _
      $region12: #{tpu_custom_call.1} parent=5 // pred_fallthru
        _
      %p204 = scmp.lt.s32.totalorder %s12, 24
      // Predicated region
      $region21: #{tpu_custom_call.1} parent=5 // pred_check
        %p205 = pneg %p204
      $region22: #{tpu_custom_call.1} parent=5 // pred_check_branch
        %207 = sbr.rel (%p205) target = $region24
      $region23: #{tpu_custom_call.1} parent=5 // pred_region
        // Predicated region
        $region25: #{tpu_custom_call.1} parent=23 // pred_check
          %p208 = pneg %p73
        $region26: #{tpu_custom_call.1} parent=23 // pred_check_branch
          %210 = sbr.rel (%p208) target = $region28
        $region27: #{tpu_custom_call.1} parent=23 // pred_region
          %s211 = smul.u32 %s19, 10
          %s212 = sadd.s32 %s211, %s22
          %s213 = sadd.s32 %s212, %s23
          %s214 = smul.u32 2, %s21
          %p215 = scmp.lt.s32.totalorder %s213, 9
          %s216 = scalar_select %p215, %s213, 9
          %p217 = scmp.lt.s32.totalorder %s214, 1
          %s218 = scalar_select %p217, %s214, 1
          %s219 = smul.addr %s218, 8
          %s220 = smul.addr %s216, 16
          %s221 = sadd.s32 %s219, %s220
          %s222 = smul.addr %s221, 4
          %s223 = scalar_lea.vmem %s0, %s222
          %s224 = smul.u32 %s19, 10
          %s225 = sadd.s32 %s224, %s22
          %s226 = sadd.s32 %s225, %s23
          %s227 = smul.u32 2, %s21
        $region28: #{tpu_custom_call.1} parent=23 // pred_fallthru
          _
      $region24: #{tpu_custom_call.1} parent=5 // pred_fallthru
        _
      %p228 = scmp.le.s32.totalorder 1, %s12
      %p229 = scmp.lt.s32.totalorder %s12, 25
      %p230 = pnand %p228, %p229
      %p231 = pneg %p230
      // Predicated region
      $region29: #{tpu_custom_call.1} parent=5 // pred_check
        _
      $region30: #{tpu_custom_call.1} parent=5 // pred_check_branch
        %233 = sbr.rel (%p230) target = $region32
      $region31: #{tpu_custom_call.1} parent=5 // pred_region
        %s234 = ssub.s32 %s12, 1
        %s235 = smul.u32 %s24, 10
        %s236 = sadd.s32 %s235, %s27
        %s237 = sadd.s32 %s236, %s28
        %s238 = smul.u32 2, %s26
        %p239 = scmp.lt.s32.totalorder %s237, 9
        %s240 = scalar_select %p239, %s237, 9
        %p241 = scmp.lt.s32.totalorder %s238, 1
        %s242 = scalar_select %p241, %s238, 1
        %s243 = smul.addr %s242, 8
        %s244 = smul.addr %s240, 16
        %s245 = sadd.s32 %s243, %s244
        %s246 = smul.addr %s245, 4
        %s247 = scalar_lea.vmem %s0, %s246
        %p248 = pneg %p79
        %p249 = pneg %p76
        %p250 = scmp.lt.s32.totalorder %s24, 0
        %s251 = scalar_select %p250, %s24, 0
        %p252 = scmp.lt.s32.totalorder %s25, 0
        %s253 = scalar_select %p252, %s25, 0
        %s254 = smul.addr %s251, 15
        %s255 = sadd.s32 %s253, %s254
        %s256 = smul.addr %s255, 4
        %s257 = scalar_lea.vmem %s1, %s256
        %p258 = pneg %p107
        %p259 = pneg %p104
        %p260 = scmp.lt.s32.totalorder %s24, 0
        %s261 = scalar_select %p260, %s24, 0
        %p262 = scmp.lt.s32.totalorder %s25, 0
        %s263 = scalar_select %p262, %s25, 0
        %s264 = sadd.s32 %s263, %s261
        %s265 = scalar_lea.vmem %s2, %s264
        %p266 = pneg %p135
        %p267 = pneg %p132
        %p268 = pneg %p169
        %p269 = pneg %p166
        %s270 = sand.u32 %s156, 1
        %s271 = scalar_lea.sflag [#allocation3], %s270
        %s272 = sand.u32 %s156, 1
        %s273 = smul.addr %s272, 128
        %s274 = scalar_lea.vmem [#allocation2], %s273
        %s275 = smul.u32 %s24, 10
        %s276 = sadd.s32 %s275, %s27
        %s277 = sadd.s32 %s276, %s28
        %s278 = smul.u32 2, %s26
        %p279 = scmp.lt.s32.totalorder %s277, 9
        %s280 = scalar_select %p279, %s277, 9
        %p281 = scmp.lt.s32.totalorder %s278, 1
        %s282 = scalar_select %p281, %s278, 1
        %s283 = smul.addr %s282, 8
        %s284 = smul.addr %s280, 16
        %s285 = sadd.s32 %s283, %s284
        %s286 = smul.addr %s285, 4
        %s287 = scalar_lea.vmem %s0, %s286
        %s288 = smul.u32 %s24, 10
        %s289 = sadd.s32 %s288, %s27
        %s290 = sadd.s32 %s289, %s28
        %s291 = smul.u32 2, %s26
        %p292 = scmp.lt.s32.totalorder %s24, 0
        %s293 = scalar_select %p292, %s24, 0
        %p294 = scmp.lt.s32.totalorder %s25, 0
        %s295 = scalar_select %p294, %s25, 0
        %s296 = smul.addr %s293, 15
        %s297 = sadd.s32 %s295, %s296
        %s298 = smul.addr %s297, 4
        %s299 = scalar_lea.vmem %s1, %s298
        %p300 = scmp.lt.s32.totalorder %s24, 0
        %s301 = scalar_select %p300, %s24, 0
        %p302 = scmp.lt.s32.totalorder %s25, 0
        %s303 = scalar_select %p302, %s25, 0
        %s304 = sadd.s32 %s303, %s301
        %s305 = scalar_lea.vmem %s2, %s304
        %s306 = smul.u32 %s24, 8
        %s307 = sadd.s32 %s306, %s27
        %s308 = smul.u32 2, %s26
        %p310 = scmp.eq.s32.totalorder %s28, 0
        // Predicated region
        $region33: #{tpu_custom_call.1} parent=31 // pred_check
          %p311 = pneg %p310
        $region34: #{tpu_custom_call.1} parent=31 // pred_check_branch
          %313 = sbr.rel (%p311) target = $region36
        $region35: #{tpu_custom_call.1} parent=31 // pred_region
          %v314 = vld [vmem:[%s305] sm:$0x1]
          %v316 = vlaneseq
          %v317 = vshrl.u32 %v316, 7
          %v318 = vsub.s32 0, %v317
          %v319 = vrot.slane %v314, %v318
          %321 = vst [vmem:[%s274] sm:$0xff] %v319
          %322 = vst [vmem:[%s274 + $0x8] sm:$0xff] %v319
          %323 = vst [vmem:[%s274 + $0x10] sm:$0xff] %v319
          %324 = vst [vmem:[%s274 + $0x18] sm:$0xff] %v319
          %325 = vst [vmem:[%s274 + $0x20] sm:$0xff] %v319
          %326 = vst [vmem:[%s274 + $0x28] sm:$0xff] %v319
          %327 = vst [vmem:[%s274 + $0x30] sm:$0xff] %v319
          %328 = vst [vmem:[%s274 + $0x38] sm:$0xff] %v319
          %s329 = scalar_lea.vmem %s274, 64 [#allocation2]
          %330 = vst [vmem:[%s329] sm:$0xff] %v319
          %331 = vst [vmem:[%s329 + $0x8] sm:$0xff] %v319
          %332 = vst [vmem:[%s329 + $0x10] sm:$0xff] %v319
          %333 = vst [vmem:[%s329 + $0x18] sm:$0xff] %v319
          %334 = vst [vmem:[%s329 + $0x20] sm:$0xff] %v319
          %335 = vst [vmem:[%s329 + $0x28] sm:$0xff] %v319
          %336 = vst [vmem:[%s329 + $0x30] sm:$0xff] %v319
          %337 = vst [vmem:[%s329 + $0x38] sm:$0xff] %v319
        $region36: #{tpu_custom_call.1} parent=31 // pred_fallthru
          _
        %v338 = vld [vmem:[%s287] sm:$0xf]
        %v339 = vld [vmem:[%s287 + $0x4] sm:$0xf]
        %v340 = vld [vmem:[%s287 + $0x8] sm:$0xf]
        %v341 = vld [vmem:[%s287 + $0xc] sm:$0xf]
        %v342 = vld [vmem:[%s287 + $0x10] sm:$0xf]
        %v343 = vld [vmem:[%s287 + $0x14] sm:$0xf]
        %v344 = vld [vmem:[%s287 + $0x18] sm:$0xf]
        %v345 = vld [vmem:[%s287 + $0x1c] sm:$0xf]
        %s346 = smul.u32 %s28, 5
        %s347 = smul.addr %s346, 4
        %s348 = scalar_lea.vmem %s299, %s347
        %v349 = vld [vmem:[%s348] sm:$0xf]
        %v350 = vld [vmem:[%s348 + $0x4] sm:$0xf]
        %v351 = vld [vmem:[%s348 + $0x8] sm:$0xf]
        %v352 = vld [vmem:[%s348 + $0xc] sm:$0xf]
        %v353 = vld [vmem:[%s348 + $0x10] sm:$0x3]
        %v354 = vld [vmem:[%s274] sm:$0xff]
        %v355 = vld [vmem:[%s274 + $0x8] sm:$0xff]
        %v356 = vld [vmem:[%s274 + $0x10] sm:$0xff]
        %v357 = vld [vmem:[%s274 + $0x18] sm:$0xff]
        %v358 = vld [vmem:[%s274 + $0x20] sm:$0xff]
        %v359 = vld [vmem:[%s274 + $0x28] sm:$0xff]
        %v360 = vld [vmem:[%s274 + $0x30] sm:$0xff]
        %v361 = vld [vmem:[%s274 + $0x38] sm:$0xff]
        %v370 = vunpack.c.l.b16 %v338
        %v371 = vunpack.c.l.b16 %v339
        %v372 = vunpack.c.l.b16 %v340
        %v373 = vunpack.c.l.b16 %v341
        %v374 = vunpack.c.l.b16 %v342
        %v375 = vunpack.c.l.b16 %v343
        %v376 = vunpack.c.l.b16 %v344
        %v377 = vunpack.c.l.b16 %v345
        %v378 = vpack.c.b16 %v371, %v370
        %v379 = vpack.c.b16 %v373, %v372
        %v380 = vpack.c.b16 %v375, %v374
        %v381 = vpack.c.b16 %v377, %v376
        %v387 = vunpack.c.l.b16 %v349
        %v388 = vunpack.c.l.b16 %v350
        %v389 = vunpack.c.l.b16 %v351
        %v390 = vunpack.c.l.b16 %v352
        %v391 = vunpack.c.l.b16 %v353
        %v392 = vpack.c.b16 %v388, %v387
        %v393 = vpack.c.b16 %v390, %v389
        %v394 = vpack.c.b16 %v391, %v391
        %vm397 = vcmask 293888
        %v399 = vsel %vm397, %v378, 0
        %v402 = vsel %vm397, %v379, 0
        %v405 = vsel %vm397, %v380, 0
        %v408 = vsel %vm397, %v381, 0
        %vm410 = vcmask 1041408
        %v412 = vsel %vm410, %v394, 0
        %414 = vmatprep.subr.bf16.mxu0 0
        %415 = vmatpush1.bf16.msra.mxu0 %v392
        %416 = vmatprep.subr.bf16.mxu0 0
        %417 = vmatpush1.bf16.msra.mxu0 %v393
        %418 = vmatprep.subr.bf16.mxu0 0
        %419 = vmatpush1.bf16.msra.mxu0 %v412
        %420 = vmatprep.subr.bf16.mxu0 0
        %421 = vmatpush1.bf16.msra.mxu0 0
        %422 = vmatprep.subr.bf16.mxu0 0
        %423 = vmatpush1.bf16.msra.mxu0 0
        %424 = vmatprep.subr.bf16.mxu0 0
        %425 = vmatpush1.bf16.msra.mxu0 0
        %426 = vmatprep.subr.bf16.mxu0 0
        %427 = vmatpush1.bf16.msra.mxu0 0
        %428 = vmatprep.subr.bf16.mxu0 0
        %429 = vmatpush1.bf16.msra.mxu0 0
        %430 = vmatprep.subr.bf16.mxu0 0
        %431 = vmatpush1.bf16.msra.mxu0 0
        %432 = vmatprep.subr.bf16.mxu0 0
        %433 = vmatpush1.bf16.msra.mxu0 0
        %434 = vmatprep.subr.bf16.mxu0 0
        %435 = vmatpush1.bf16.msra.mxu0 0
        %436 = vmatprep.subr.bf16.mxu0 0
        %437 = vmatpush1.bf16.msra.mxu0 0
        %438 = vmatprep.subr.bf16.mxu0 0
        %439 = vmatpush1.bf16.msra.mxu0 0
        %440 = vmatprep.subr.bf16.mxu0 0
        %441 = vmatpush1.bf16.msra.mxu0 0
        %442 = vmatprep.subr.bf16.mxu0 0
        %443 = vmatpush1.bf16.msra.mxu0 0
        %444 = vmatprep.subr.bf16.mxu0 0
        %445 = vmatpush1.bf16.msra.mxu0 0
        %446 = vmatprep.mubr.bf16.mxu0 0
        %447 = vmatmul.mubr.bf16.gmra.mrb[0].mxu0 %v399
        %v448 = vpop.f32.mrb[0].mxu0
        %v449 = vadd.f32 0.0, %v448
        %v450 = vpop.f32.mrb[0].mxu0
        %v451 = vpop.f32.mrb[0].mxu0
        %v452 = vadd.f32 0.0, %v451
        %v453 = vpop.f32.mrb[0].mxu0
        %454 = vmatprep.mubr.bf16.mxu0 0
        %455 = vmatmul.mubr.bf16.gmra.mrb[0].mxu0 %v402
        %v456 = vpop.f32.mrb[0].mxu0
        %v457 = vadd.f32 0.0, %v456
        %v458 = vpop.f32.mrb[0].mxu0
        %v459 = vpop.f32.mrb[0].mxu0
        %v460 = vadd.f32 0.0, %v459
        %v461 = vpop.f32.mrb[0].mxu0
        %462 = vmatprep.mubr.bf16.mxu0 0
        %463 = vmatmul.mubr.bf16.gmra.mrb[0].mxu0 %v405
        %v464 = vpop.f32.mrb[0].mxu0
        %v465 = vadd.f32 0.0, %v464
        %v466 = vpop.f32.mrb[0].mxu0
        %v467 = vpop.f32.mrb[0].mxu0
        %v468 = vadd.f32 0.0, %v467
        %v469 = vpop.f32.mrb[0].mxu0
        %470 = vmatprep.mubr.bf16.mxu0 0
        %471 = vmatmul.mubr.bf16.gmra.mrb[0].mxu0 %v408
        %v472 = vpop.f32.mrb[0].mxu0
        %v473 = vadd.f32 0.0, %v472
        %v474 = vpop.f32.mrb[0].mxu0
        %v475 = vpop.f32.mrb[0].mxu0
        %v476 = vadd.f32 0.0, %v475
        %v477 = vpop.f32.mrb[0].mxu0
        %478 = vdwg.mxu0
        %v479 = vadd.f32 %v354, %v449
        %v480 = vadd.f32 %v355, %v452
        %v481 = vadd.f32 %v356, %v457
        %v482 = vadd.f32 %v357, %v460
        %v483 = vadd.f32 %v358, %v465
        %v484 = vadd.f32 %v359, %v468
        %v485 = vadd.f32 %v360, %v473
        %v486 = vadd.f32 %v361, %v476
        %487 = vst [vmem:[%s274] sm:$0xff] %v479
        %488 = vst [vmem:[%s274 + $0x8] sm:$0xff] %v480
        %489 = vst [vmem:[%s274 + $0x10] sm:$0xff] %v481
        %490 = vst [vmem:[%s274 + $0x18] sm:$0xff] %v482
        %491 = vst [vmem:[%s274 + $0x20] sm:$0xff] %v483
        %492 = vst [vmem:[%s274 + $0x28] sm:$0xff] %v484
        %493 = vst [vmem:[%s274 + $0x30] sm:$0xff] %v485
        %494 = vst [vmem:[%s274 + $0x38] sm:$0xff] %v486
        %s495 = scalar_lea.vmem %s287, 32
        %v496 = vld [vmem:[%s495] sm:$0xf]
        %v497 = vld [vmem:[%s495 + $0x4] sm:$0xf]
        %v498 = vld [vmem:[%s495 + $0x8] sm:$0xf]
        %v499 = vld [vmem:[%s495 + $0xc] sm:$0xf]
        %v500 = vld [vmem:[%s495 + $0x10] sm:$0xf]
        %v501 = vld [vmem:[%s495 + $0x14] sm:$0xf]
        %v502 = vld [vmem:[%s495 + $0x18] sm:$0xf]
        %v503 = vld [vmem:[%s495 + $0x1c] sm:$0xf]
        %v504 = vld [vmem:[%s348] sm:$0xf]
        %v505 = vld [vmem:[%s348 + $0x4] sm:$0xf]
        %v506 = vld [vmem:[%s348 + $0x8] sm:$0xf]
        %v507 = vld [vmem:[%s348 + $0xc] sm:$0xf]
        %v508 = vld [vmem:[%s348 + $0x10] sm:$0x3]
        %s509 = scalar_lea.vmem %s274, 64 [#allocation2]
        %v510 = vld [vmem:[%s509] sm:$0xff]
        %v511 = vld [vmem:[%s509 + $0x8] sm:$0xff]
        %v512 = vld [vmem:[%s509 + $0x10] sm:$0xff]
        %v513 = vld [vmem:[%s509 + $0x18] sm:$0xff]
        %v514 = vld [vmem:[%s509 + $0x20] sm:$0xff]
        %v515 = vld [vmem:[%s509 + $0x28] sm:$0xff]
        %v516 = vld [vmem:[%s509 + $0x30] sm:$0xff]
        %v517 = vld [vmem:[%s509 + $0x38] sm:$0xff]
        %v526 = vunpack.c.l.b16 %v496
        %v527 = vunpack.c.l.b16 %v497
        %v528 = vunpack.c.l.b16 %v498
        %v529 = vunpack.c.l.b16 %v499
        %v530 = vunpack.c.l.b16 %v500
        %v531 = vunpack.c.l.b16 %v501
        %v532 = vunpack.c.l.b16 %v502
        %v533 = vunpack.c.l.b16 %v503
        %v534 = vpack.c.b16 %v527, %v526
        %v535 = vpack.c.b16 %v529, %v528
        %v536 = vpack.c.b16 %v531, %v530
        %v537 = vpack.c.b16 %v533, %v532
        %v543 = vunpack.c.l.b16 %v504
        %v544 = vunpack.c.l.b16 %v505
        %v545 = vunpack.c.l.b16 %v506
        %v546 = vunpack.c.l.b16 %v507
        %v547 = vunpack.c.l.b16 %v508
        %v548 = vpack.c.b16 %v544, %v543
        %v549 = vpack.c.b16 %v546, %v545
        %v550 = vpack.c.b16 %v547, %v547
        %v554 = vsel %vm397, %v534, 0
        %v557 = vsel %vm397, %v535, 0
        %v560 = vsel %vm397, %v536, 0
        %v563 = vsel %vm397, %v537, 0
        %v566 = vsel %vm410, %v550, 0
        %568 = vmatprep.subr.bf16.mxu0 0
        %569 = vmatpush1.bf16.msra.mxu0 %v548
        %570 = vmatprep.subr.bf16.mxu0 0
        %571 = vmatpush1.bf16.msra.mxu0 %v549
        %572 = vmatprep.subr.bf16.mxu0 0
        %573 = vmatpush1.bf16.msra.mxu0 %v566
        %574 = vmatprep.subr.bf16.mxu0 0
        %575 = vmatpush1.bf16.msra.mxu0 0
        %576 = vmatprep.subr.bf16.mxu0 0
        %577 = vmatpush1.bf16.msra.mxu0 0
        %578 = vmatprep.subr.bf16.mxu0 0
        %579 = vmatpush1.bf16.msra.mxu0 0
        %580 = vmatprep.subr.bf16.mxu0 0
        %581 = vmatpush1.bf16.msra.mxu0 0
        %582 = vmatprep.subr.bf16.mxu0 0
        %583 = vmatpush1.bf16.msra.mxu0 0
        %584 = vmatprep.subr.bf16.mxu0 0
        %585 = vmatpush1.bf16.msra.mxu0 0
        %586 = vmatprep.subr.bf16.mxu0 0
        %587 = vmatpush1.bf16.msra.mxu0 0
        %588 = vmatprep.subr.bf16.mxu0 0
        %589 = vmatpush1.bf16.msra.mxu0 0
        %590 = vmatprep.subr.bf16.mxu0 0
        %591 = vmatpush1.bf16.msra.mxu0 0
        %592 = vmatprep.subr.bf16.mxu0 0
        %593 = vmatpush1.bf16.msra.mxu0 0
        %594 = vmatprep.subr.bf16.mxu0 0
        %595 = vmatpush1.bf16.msra.mxu0 0
        %596 = vmatprep.subr.bf16.mxu0 0
        %597 = vmatpush1.bf16.msra.mxu0 0
        %598 = vmatprep.subr.bf16.mxu0 0
        %599 = vmatpush1.bf16.msra.mxu0 0
        %600 = vmatprep.mubr.bf16.mxu0 0
        %601 = vmatmul.mubr.bf16.gmra.mrb[0].mxu0 %v554
        %v602 = vpop.f32.mrb[0].mxu0
        %v603 = vadd.f32 0.0, %v602
        %v604 = vpop.f32.mrb[0].mxu0
        %v605 = vpop.f32.mrb[0].mxu0
        %v606 = vadd.f32 0.0, %v605
        %v607 = vpop.f32.mrb[0].mxu0
        %608 = vmatprep.mubr.bf16.mxu0 0
        %609 = vmatmul.mubr.bf16.gmra.mrb[0].mxu0 %v557
        %v610 = vpop.f32.mrb[0].mxu0
        %v611 = vadd.f32 0.0, %v610
        %v612 = vpop.f32.mrb[0].mxu0
        %v613 = vpop.f32.mrb[0].mxu0
        %v614 = vadd.f32 0.0, %v613
        %v615 = vpop.f32.mrb[0].mxu0
        %616 = vmatprep.mubr.bf16.mxu0 0
        %617 = vmatmul.mubr.bf16.gmra.mrb[0].mxu0 %v560
        %v618 = vpop.f32.mrb[0].mxu0
        %v619 = vadd.f32 0.0, %v618
        %v620 = vpop.f32.mrb[0].mxu0
        %v621 = vpop.f32.mrb[0].mxu0
        %v622 = vadd.f32 0.0, %v621
        %v623 = vpop.f32.mrb[0].mxu0
        %624 = vmatprep.mubr.bf16.mxu0 0
        %625 = vmatmul.mubr.bf16.gmra.mrb[0].mxu0 %v563
        %v626 = vpop.f32.mrb[0].mxu0
        %v627 = vadd.f32 0.0, %v626
        %v628 = vpop.f32.mrb[0].mxu0
        %v629 = vpop.f32.mrb[0].mxu0
        %v630 = vadd.f32 0.0, %v629
        %v631 = vpop.f32.mrb[0].mxu0
        %632 = vdwg.mxu0
        %v633 = vadd.f32 %v510, %v603
        %v634 = vadd.f32 %v511, %v606
        %v635 = vadd.f32 %v512, %v611
        %v636 = vadd.f32 %v513, %v614
        %v637 = vadd.f32 %v514, %v619
        %v638 = vadd.f32 %v515, %v622
        %v639 = vadd.f32 %v516, %v627
        %v640 = vadd.f32 %v517, %v630
        %641 = vst [vmem:[%s509] sm:$0xff] %v633
        %642 = vst [vmem:[%s509 + $0x8] sm:$0xff] %v634
        %643 = vst [vmem:[%s509 + $0x10] sm:$0xff] %v635
        %644 = vst [vmem:[%s509 + $0x18] sm:$0xff] %v636
        %645 = vst [vmem:[%s509 + $0x20] sm:$0xff] %v637
        %646 = vst [vmem:[%s509 + $0x28] sm:$0xff] %v638
        %647 = vst [vmem:[%s509 + $0x30] sm:$0xff] %v639
        %648 = vst [vmem:[%s509 + $0x38] sm:$0xff] %v640
        %s649 = sand.u32 %s156, 1
        %s650 = scalar_lea.sflag [#allocation3], %s649
        %s651 = sand.u32 %s156, 1
        %s652 = smul.addr %s651, 128
        %s653 = scalar_lea.vmem [#allocation2], %s652
        // Predicated region
        $region37: #{tpu_custom_call.1} parent=31 // pred_check
          %p654 = pneg %p166
        $region38: #{tpu_custom_call.1} parent=31 // pred_check_branch
          %656 = sbr.rel (%p654) target = $region40
        $region39: #{tpu_custom_call.1} parent=31 // pred_region
          %s657 = smul.u32 %s24, 8
          %s658 = sadd.s32 %s657, %s27
          %s659 = smul.u32 2, %s26
          %s661 = ssub.s32 2048, 2048
          %662 = vsyncadd %s650, %s661
          %s663 = smul.addr %s659, 8
          %s664 = sadd.s32 %s25, %s663
          %s665 = smul.addr %s658, 16
          %s666 = sadd.s32 %s664, %s665
          %s667 = smul.addr %s666, 128
          %s668 = scalar_lea.hbm %s3, %s667
          %s669 = sshll.u32 %s653, 4
          %s670 = int_to_ptr.vmem [resolvable:$true] %s669
          %675 = dma.vmem_to_hbm [thread:$0]  %s670, 2048, %s668, %s650, 128, 128, 8
        $region40: #{tpu_custom_call.1} parent=31 // pred_fallthru
          _
      $region32: #{tpu_custom_call.1} parent=5 // pred_fallthru
        _
      %p676 = scmp.le.s32.totalorder 2, %s12
      // Predicated region
      $region41: #{tpu_custom_call.1} parent=5 // pred_check
        %p677 = pneg %p676
      $region42: #{tpu_custom_call.1} parent=5 // pred_check_branch
        %679 = sbr.rel (%p677) target = $region44
      $region43: #{tpu_custom_call.1} parent=5 // pred_region
        %s680 = ssub.s32 %s12, 2
        // Predicated region
        $region45: #{tpu_custom_call.1} parent=43 // pred_check
          %p681 = pneg %p172
        $region46: #{tpu_custom_call.1} parent=43 // pred_check_branch
          %683 = sbr.rel (%p681) target = $region48
        $region47: #{tpu_custom_call.1} parent=43 // pred_region
          %s684 = sand.u32 %s157, 1
          %s685 = scalar_lea.sflag [#allocation3], %s684
          %s686 = sand.u32 %s157, 1
          %s687 = smul.addr %s686, 128
          %s688 = scalar_lea.vmem [#allocation2], %s687
          %689 = dma.done %s685, 2048
        $region48: #{tpu_custom_call.1} parent=43 // pred_fallthru
          _
      $region44: #{tpu_custom_call.1} parent=5 // pred_fallthru
        _
    $region6: #{tpu_custom_call.1} parent=1 // loop_footer
      %s16 = sadd.s32 1, %s12
    $region7: #{tpu_custom_call.1} parent=1 // loop_footer_branch
      %11 = sbr.rel target = $region3
    $region8: #{tpu_custom_call.1} parent=1 // loop_exit
      _
    %690 = vsyncpa [#allocation3], 1
    %s691 = scalar_lea.sflag [#allocation3], 1
    %692 = vsyncpa %s691, 1

</llo_original>
